<compile_context>
chip_gen: v6e
topology: v6e:2x2x1
jax: 0.10.0
libtpu: 0.0.40
codegen_flags: <defaults>
</compile_context>

<pallas_src>
import jax
import jax.numpy as jnp
from jax.experimental import pallas as pl
from jax.experimental.pallas import tpu as pltpu

_LANES = 512  # lane-dense slab width (multiple of 128)


def _exp_act_kernel(alpha_ref, x_ref, o_ref):
    # alpha_ref: (1,) f32 in SMEM (scalar prefetch); x_ref / o_ref: VMEM tiles
    # (rank 1 or 2).  f32 math regardless of I/O dtype.
    alpha = alpha_ref[0]
    x = x_ref[...].astype(jnp.float32)
    o_ref[...] = (alpha * jnp.exp(x)).astype(o_ref.dtype)


def _round_up(v, m):
    return ((v + m - 1) // m) * m


def _vmem_capacity_bytes():
    # Per-core physical VMEM; fall back to the smallest current part (v7x: 64 MiB).
    try:
        cap = getattr(pltpu.get_tpu_info(), "vmem_capacity_bytes", None)
        if cap:
            return int(cap)
    except Exception:
        pass
    return 64 << 20


def _launch(x_arr, alpha_arr, block_shape, grid, vmem_limit, cost):
    zeros_tail = (0,) * (len(block_shape) - 1)

    def index_map(i, _alpha_sref):  # scalar-prefetch ref passed positionally
        return (i,) + zeros_tail

    return pl.pallas_call(
        _exp_act_kernel,
        out_shape=jax.ShapeDtypeStruct(x_arr.shape, x_arr.dtype),
        grid_spec=pltpu.PrefetchScalarGridSpec(
            num_scalar_prefetch=1,  # alpha -> SMEM, first kernel arg
            grid=grid,
            in_specs=[pl.BlockSpec(block_shape, index_map)],
            out_specs=pl.BlockSpec(block_shape, index_map),
            # TODO(synk): sweep pipeline_mode=pl.Buffered(3) on the streaming path
            # (expected win is a few %; keep only if measured).
        ),
        compiler_params=pltpu.CompilerParams(
            dimension_semantics=("parallel",),  # shardable across v7x's 2 TCs
            vmem_limit_bytes=vmem_limit,
        ),
        cost_estimate=cost,
    )(alpha_arr, x_arr)


def exponential_function(x, alpha=0.01, *, lanes=_LANES, target_block_bytes=None):
    """alpha * exp(x), matching PyTorch ExponentialFunction.forward."""
    orig_shape = x.shape
    orig_dtype = x.dtype
    n = x.size
    if n == 0:
        return x

    dtype_bytes = jnp.dtype(orig_dtype).itemsize
    pack = max(1, 4 // dtype_bytes)   # sublane packing factor (1 f32 / 2 bf16 / 4 int8)
    sub_q = 8 * pack                  # row quantum: 8 f32 / 16 bf16 / 32 int8

    vmem_cap = _vmem_capacity_bytes()
    if target_block_bytes is None:
        # Bigger blocks on 128 MiB-VMEM parts (v5e/v6e); 4 MiB on v7x (64 MiB VMEM).
        target_block_bytes = (8 << 20) if vmem_cap >= (96 << 20) else (4 << 20)

    alpha_arr = jnp.asarray([alpha], dtype=jnp.float32)
    cost = pl.CostEstimate(flops=n, transcendentals=n,
                           bytes_accessed=2 * n * dtype_bytes)

    x_flat = jnp.reshape(x, (-1,))            # free (contiguous reshape)
    total_bytes = n * dtype_bytes
    small = total_bytes <= (512 << 10)        # below this, pipelining gains nothing

    if n % lanes == 0:
        # ---- lane-aligned: 2-D slab (rows, lanes), zero extra HBM passes --------
        rows = n // lanes
        row_bytes = lanes * dtype_bytes
        if small or rows <= sub_q:
            tr = rows  # single full-extent block (exempt from the 8-div rule)
        else:
            tr = max(sub_q, ((target_block_bytes // row_bytes) // sub_q) * sub_q)
            # Cap so the grid keeps >= 4 steps: DMA/compute overlap on all chips
            # and 2-TensorCore sharding on v7x even for few-MiB tensors.
            tr = min(tr, max(sub_q, _round_up(pl.cdiv(rows, 4), sub_q)))
        grid = (pl.cdiv(rows, tr),)
        block_shape = (tr, lanes)
        x_arr = jnp.reshape(x_flat, (rows, lanes))
    else:
        # ---- not lane-aligned: pad-free 1-D streaming with ragged last block ----
        # (previous version padded + sliced: two extra full HBM passes)
        quant = 1024 * pack                    # whole packed (8,128) tiles per block
        if small:
            blk = n                            # single full-extent block
        else:
            blk = max(quant, ((1 << 20) // dtype_bytes // quant) * quant)   # ~1 MiB
            blk = min(blk, max(quant, _round_up(pl.cdiv(n, 4), quant)))     # >= 4 steps
        grid = (pl.cdiv(n, blk),)
        block_shape = (blk,)
        x_arr = x_flat

    block_bytes = dtype_bytes
    for d in block_shape:
        block_bytes *= d
    need = 4 * block_bytes  # double-buffered input + output
    vmem_limit = int(min(max(need + (8 << 20), 32 << 20), vmem_cap // 2))
    vmem_limit = max(vmem_limit, need + (2 << 20))

    out = _launch(x_arr, alpha_arr, block_shape, grid, vmem_limit, cost)
    return jnp.reshape(out, orig_shape)


if __name__ == "__main__":
    alpha = 0.01

    # Primary: NCHW input, small, lane-aligned (2*4*16*16 = 2048 = 4 x 512).
    x = jax.random.normal(jax.random.PRNGKey(0), (2, 4, 16, 16), dtype=jnp.float32)
    out = jax.block_until_ready(exponential_function(x, alpha=alpha))
    ref = alpha * jnp.exp(x)
    assert out.shape == x.shape and out.dtype == x.dtype
    assert jnp.allclose(out, ref, rtol=1e-5, atol=1e-6)

    # Small non-lane-aligned shape -> pad-free 1-D path, single full block.
    x2 = jax.random.normal(jax.random.PRNGKey(1), (3, 5, 7), dtype=jnp.float32)
    out2 = jax.block_until_ready(exponential_function(x2, alpha=alpha))
    assert out2.shape == x2.shape
    assert jnp.allclose(out2, alpha * jnp.exp(x2), rtol=1e-5, atol=1e-6)

    # Medium aligned shape -> exercises the multi-step (>=4) pipelined grid.
    x3 = jax.random.normal(jax.random.PRNGKey(2), (1, 8, 64, 512), dtype=jnp.float32)
    out3 = jax.block_until_ready(exponential_function(x3, alpha=alpha))
    assert jnp.allclose(out3, alpha * jnp.exp(x3), rtol=1e-5, atol=1e-6)

    # Medium non-aligned shape -> exercises the multi-block ragged 1-D path.
    x4 = jax.random.normal(jax.random.PRNGKey(3), (3, 217, 219), dtype=jnp.float32)
    out4 = jax.block_until_ready(exponential_function(x4, alpha=alpha))
    assert jnp.allclose(out4, alpha * jnp.exp(x4), rtol=1e-5, atol=1e-6)

    print("KERNEL_OK")
</pallas_src>

<mosaic_0001>
module attributes {stable_mosaic.version = 11 : i64} {
  func.func @_exp_act_kernel(%arg0: i32, %arg1: memref<1xf32, #tpu.memory_space<smem>>, %arg2: memref<4x512xf32, #tpu.memory_space<vmem>>, %arg3: memref<4x512xf32, #tpu.memory_space<vmem>>) attributes {dimension_semantics = [#tpu.dimension_semantics<parallel>], iteration_bounds = array<i64: 1>, scalar_prefetch = 1 : i64, scratch_operands = 0 : i64, tpu.core_type = #tpu.core_type<tc>, window_params = [{transform_indices = @transform_0, window_bounds = array<i64: 4, 512>}, {transform_indices = @transform_1, window_bounds = array<i64: 4, 512>}]} {
    %c0 = arith.constant 0 : index
    %0 = memref.load %arg1[%c0] : memref<1xf32, #tpu.memory_space<smem>>
    %c0_0 = arith.constant 0 : index
    %c0_1 = arith.constant 0 : index
    %1 = vector.load %arg2[%c0_0, %c0_1] : memref<4x512xf32, #tpu.memory_space<vmem>>, vector<4x512xf32>
    %2 = math.exp %1 : vector<4x512xf32>
    %3 = vector.broadcast %0 : f32 to vector<4x512xf32>
    %4 = arith.mulf %3, %2 : vector<4x512xf32>
    %c0_2 = arith.constant 0 : index
    %c0_3 = arith.constant 0 : index
    %5 = vector.load %arg3[%c0_2, %c0_3] : memref<4x512xf32, #tpu.memory_space<vmem>>, vector<4x512xf32>
    tpu.vector_store %arg3[%c0_2, %c0_3], %4 {strides = array<i32>} : memref<4x512xf32, #tpu.memory_space<vmem>>, vector<4x512xf32>,
    return
  }
  func.func @transform_0(%arg0: i32, %arg1: memref<1xf32, #tpu.memory_space<smem>>) -> (i32, i32) {
    %c0_i32 = arith.constant 0 : i32
    %c0_i32_0 = arith.constant 0 : i32
    return %arg0, %c0_i32 : i32, i32
  }
  func.func @transform_1(%arg0: i32, %arg1: memref<1xf32, #tpu.memory_space<smem>>) -> (i32, i32) {
    %c0_i32 = arith.constant 0 : i32
    %c0_i32_0 = arith.constant 0 : i32
    return %arg0, %c0_i32 : i32, i32
  }
}

</mosaic_0001>

<llo_original>
// kernel: tpu_custom_call.1
$region0: #{tpu_custom_call.1}
  #allocation0 [shape = 'u32[]', space=smem, size = 0x4, offset = 0x4, fixed_abs, tag = 'smem constant byte address 0x4 - core index']
  #allocation1 [shape = 'u32[144,128]{1,0:T(1,128)}', space=vmem, size = 0x12000, scoped, tag = 'internal scratch']
  #allocation2 [shape = 's32[1]{0}', space=sflag, size = 0x4, scoped, tag = 'scoped memory for tpu_custom_call.1']
  #allocation3 [shape = 'f32[1]{0:T(128)S(6)}', space=smem, size = 0x200, scoped, tag = 'prefetched SMEM operand 0']
  %s0 = inlined_call_operand.<no memory space> [shape: f32[1], index: 0, kind: input, shape index: {}]
  %s1 = inlined_call_operand.hbm [shape: f32[4,512], index: 1, kind: input, shape index: {}]
  %s2 = inlined_call_operand.hbm [shape: f32[4,512], index: 2, kind: output, shape index: {}]
  %s3 = sld [smem:[#allocation0]]
  $region18: #{tpu_custom_call.1} parent=0
    _
  %s5 = ssub.s32 1, %s3
  %s6 = scalar_select 0, %s5, %s3
  %7 = sst [smem:[#allocation3]] %s0
  $region1: #{tpu_custom_call.1} parent=0
    #allocation4 [shape = 'u8[8192]{0}', space=vmem, size = 0x2000, scoped, tag = 'input window, operand 1, single buffered']
    #allocation5 [shape = 's32[1]{0}', space=sflag, size = 0x4, scoped, tag = 'scoped memory for tpu_custom_call.1']
    #allocation6 [shape = 's32[1]{0}', space=sflag, size = 0x4, scoped, tag = 'scoped memory for tpu_custom_call.1']
    #allocation7 [shape = 'u8[8192]{0}', space=vmem, size = 0x2000, scoped, tag = 'output window, operand 0, single buffered']
    %8 = vsyncpa [#allocation5], 0
    %9 = vsyncpa [#allocation6], 0
    // Predicated region
    $region2: #{tpu_custom_call.1} parent=1 // pred_check
      _
    $region3: #{tpu_custom_call.1} parent=1 // pred_check_branch
      %11 = sbr.rel (0) target = $region5
    $region4: #{tpu_custom_call.1} parent=1 // pred_region
      %s13 = ssub.s32 256, 256
      %14 = vsyncadd [#allocation5], %s13
      %s16 = sshll.u32 [#allocation4], 4
      %s17 = int_to_ptr.vmem [resolvable:$true] %s16
      %19 = dma.hbm_to_vmem [thread:$0]  %s1, 256, %s17, [#allocation5]
    $region5: #{tpu_custom_call.1} parent=1 // pred_fallthru
      _
    // Predicated region
    $region6: #{tpu_custom_call.1} parent=1 // pred_check
      _
    $region7: #{tpu_custom_call.1} parent=1 // pred_check_branch
      %21 = sbr.rel (0) target = $region9
    $region8: #{tpu_custom_call.1} parent=1 // pred_region
      %22 = dma.done [#allocation5], 256
    $region9: #{tpu_custom_call.1} parent=1 // pred_fallthru
      _
    %s23 = sld [smem:[#allocation3]]
    %v24 = vld [vmem:[#allocation4] sm:$0xff]
    %v25 = vld [vmem:[#allocation4 + $0x8] sm:$0xff]
    %v26 = vmul.f32 %v24, 1.442695
    %v27 = vpow.pop %v26
    %v28 = vmul.f32 %v25, 1.442695
    %v29 = vpow.pop %v28
    %v30 = vstv %s23
    %v31 = vmul.f32 %v30, %v27
    %v32 = vmul.f32 %v30, %v29
    %33 = vst [vmem:[#allocation7] sm:$0xff] %v31
    %34 = vst [vmem:[#allocation7 + $0x8] sm:$0xff] %v32
    // Predicated region
    $region10: #{tpu_custom_call.1} parent=1 // pred_check
      _
    $region11: #{tpu_custom_call.1} parent=1 // pred_check_branch
      %36 = sbr.rel (0) target = $region13
    $region12: #{tpu_custom_call.1} parent=1 // pred_region
      %s38 = ssub.s32 256, 256
      %39 = vsyncadd [#allocation6], %s38
      %s41 = sshll.u32 [#allocation7], 4
      %s42 = int_to_ptr.vmem [resolvable:$true] %s41
      %44 = dma.vmem_to_hbm [thread:$0]  %s42, 256, %s2, [#allocation6]
    $region13: #{tpu_custom_call.1} parent=1 // pred_fallthru
      _
    // Predicated region
    $region14: #{tpu_custom_call.1} parent=1 // pred_check
      _
    $region15: #{tpu_custom_call.1} parent=1 // pred_check_branch
      %46 = sbr.rel (0) target = $region17
    $region16: #{tpu_custom_call.1} parent=1 // pred_region
      %47 = dma.done [#allocation6], 256
    $region17: #{tpu_custom_call.1} parent=1 // pred_fallthru
      _
    %48 = vsyncpa [#allocation5], 1
    %49 = vsyncpa [#allocation6], 1

</llo_original>
